<compile_context>
chip_gen: v7x
topology: tpu7x:2x2x1
jax: 0.10.0
libtpu: 0.0.40
codegen_flags: <defaults>
</compile_context>

<pallas_src>
import functools

import jax
import jax.numpy as jnp
from jax.experimental import pallas as pl
from jax.experimental.pallas import tpu as pltpu

LANE = 128  # TPU lane width; feature dims are padded to a multiple of this.


def _round_up(x, m):
    return ((x + m - 1) // m) * m


def _make_actor_kernel(obs_dim, feat_pad):
    """Builds the kernel for one batch tile of the full 4-layer MLP.

    Ref layout (per grid step):
      ma_ref: (1, 1)          f32, SMEM  -- max_action scalar
      x_ref : (tb, obs_dim)   compute dtype, VMEM  -- unpadded input lanes
      w_ref : (4, F, F)       compute dtype, VMEM  (resident across steps)
      b_ref : (4, 1, F)       f32, VMEM            (resident across steps)
      o_ref : (tb, F)         compute dtype, VMEM
    """
    lane_pad = feat_pad - obs_dim

    def kernel(ma_ref, x_ref, w_ref, b_ref, o_ref):
        max_action = ma_ref[0, 0]
        cdt = w_ref.dtype  # MXU input dtype (bf16 or f32)

        x = x_ref[...].astype(cdt)  # (tb, obs_dim)
        if lane_pad:
            # Zero-pad the feature lanes to 128 in-kernel (cheap VPU work,
            # hidden under MXU slack). Padding is exact: padded input lanes,
            # padded weight rows/cols and bias lanes are all zero, so padded
            # hidden lanes stay zero through relu.
            x = jnp.concatenate(
                [x, jnp.zeros((x.shape[0], lane_pad), cdt)], axis=-1)

        h = x
        # Three ReLU hidden layers (statically unrolled).
        for i in range(3):
            z = jnp.dot(h, w_ref[i], preferred_element_type=jnp.float32)
            h = jnp.maximum(z + b_ref[i], 0.0).astype(cdt)
        # Output head: max_action * tanh(h @ W4 + b4)
        z = jnp.dot(h, w_ref[3], preferred_element_type=jnp.float32)
        o_ref[...] = (max_action * jnp.tanh(z + b_ref[3])).astype(o_ref.dtype)

    return kernel


def pack_actor_params(params, feat_pad, compute_dtype=jnp.bfloat16):
    """Pack w1..w4 / b1..b4 into lane-padded slabs (4,F,F) and (4,1,F)."""
    ws, bs = [], []
    for i in range(1, 5):
        w = params[f"w{i}"]
        b = params[f"b{i}"].reshape(1, -1)
        fin, fout = w.shape
        wp = jnp.zeros((feat_pad, feat_pad), jnp.float32).at[:fin, :fout].set(w)
        bp = jnp.zeros((1, feat_pad), jnp.float32).at[:, :fout].set(b)
        ws.append(wp)
        bs.append(bp)
    w_slab = jnp.stack(ws, axis=0).astype(compute_dtype)  # (4, F, F)
    b_slab = jnp.stack(bs, axis=0)                        # (4, 1, F), keep f32
    return w_slab, b_slab


def actor_forward(x, params, max_action, *, compute_dtype=jnp.bfloat16,
                  block_batch=512):
    """Run the Actor MLP in a single Pallas kernel, tiled over the batch."""
    batch, obs_dim = x.shape
    hidden = params["w2"].shape[0]
    action_dim = params["w4"].shape[1]

    # One common lane-padded feature width for every layer.
    feat_pad = _round_up(max(obs_dim, hidden, action_dim), LANE)

    w_slab, b_slab = pack_actor_params(params, feat_pad, compute_dtype)

    # --- Batch tiling -------------------------------------------------------
    # tb: multiple of 8 sublanes, up to block_batch rows per grid step.
    batch8 = _round_up(batch, 8)
    tb = min(block_batch, batch8)
    # Guarantee >= 2 grid tiles when the batch allows it, so both v7x
    # TensorCores get work under the "parallel" grid axis.
    if batch8 >= 16 and batch8 // tb < 2:
        tb = _round_up((batch8 + 1) // 2, 8)
    batch_pad = _round_up(batch8, tb)
    grid = (batch_pad // tb,)

    # x: pad the batch (rows) only and cast to the compute dtype; the lane
    # padding to 128 happens inside the kernel. No f32 padded intermediate.
    x_c = x.astype(compute_dtype)
    if batch_pad != batch:
        x_c = jnp.concatenate(
            [x_c, jnp.zeros((batch_pad - batch, obs_dim), compute_dtype)],
            axis=0)

    ma = jnp.asarray(max_action, jnp.float32).reshape(1, 1)

    # --- VMEM budget & cost estimate ---------------------------------------
    itemsize = jnp.dtype(compute_dtype).itemsize
    per_step_bytes = (
        2 * tb * obs_dim * itemsize            # double-buffered x tile
        + 2 * tb * feat_pad * itemsize         # double-buffered out tile
        + 2 * 4 * feat_pad * feat_pad * itemsize   # weight slab (resident)
        + 2 * 4 * feat_pad * 4)                # bias slab, f32
    vmem_limit_bytes = int(min(64 * 1024 * 1024,
                               max(8 * 1024 * 1024, 4 * per_step_bytes)))

    cost = pl.CostEstimate(
        flops=2 * 4 * batch_pad * feat_pad * feat_pad,
        transcendentals=batch_pad * feat_pad,   # tanh on the output head
        bytes_accessed=(batch_pad * obs_dim * itemsize          # x read
                        + batch_pad * feat_pad * itemsize       # out write
                        + 4 * feat_pad * feat_pad * itemsize    # weights
                        + 4 * feat_pad * 4))                    # biases

    kernel = _make_actor_kernel(obs_dim, feat_pad)

    out = pl.pallas_call(
        kernel,
        out_shape=jax.ShapeDtypeStruct((batch_pad, feat_pad), compute_dtype),
        grid=grid,
        in_specs=[
            # max_action scalar in SMEM (untiled).
            pl.BlockSpec(memory_space=pltpu.MemorySpace.SMEM),
            # Batch tile of x, unpadded lanes (last block dim == full dim).
            pl.BlockSpec((tb, obs_dim), lambda i: (i, 0)),
            # Packed weights / biases: same block every step -> VMEM-resident.
            pl.BlockSpec((4, feat_pad, feat_pad), lambda i: (0, 0, 0)),
            pl.BlockSpec((4, 1, feat_pad), lambda i: (0, 0, 0)),
        ],
        out_specs=pl.BlockSpec((tb, feat_pad), lambda i: (i, 0)),
        compiler_params=pltpu.CompilerParams(
            dimension_semantics=("parallel",),
            vmem_limit_bytes=vmem_limit_bytes),
        cost_estimate=cost,
    )(ma, x_c, w_slab, b_slab)

    # Strip batch / lane padding; return f32 like the PyTorch module.
    return out[:batch, :action_dim].astype(jnp.float32)


def init_actor_params(key, obs_dim, action_dim, hidden=64):
    """Deterministic synthetic init (uniform, roughly PyTorch Linear scale)."""
    dims = [(obs_dim, hidden), (hidden, hidden), (hidden, hidden),
            (hidden, action_dim)]
    params = {}
    for i, (fan_in, fan_out) in enumerate(dims, start=1):
        key, kw, kb = jax.random.split(key, 3)
        bound = 1.0 / jnp.sqrt(jnp.float32(fan_in))
        params[f"w{i}"] = jax.random.uniform(
            kw, (fan_in, fan_out), jnp.float32, -bound, bound)
        params[f"b{i}"] = jax.random.uniform(
            kb, (1, fan_out), jnp.float32, -bound, bound)
    return params


def actor_reference(x, params, max_action):
    """Pure-JAX f32 reference for correctness check."""
    h = jnp.maximum(x @ params["w1"] + params["b1"], 0.0)
    h = jnp.maximum(h @ params["w2"] + params["b2"], 0.0)
    h = jnp.maximum(h @ params["w3"] + params["b3"], 0.0)
    return max_action * jnp.tanh(h @ params["w4"] + params["b4"])


def _check(x, params, max_action):
    ref = actor_reference(x, params, max_action)

    # Float32 MXU path: tight-ish numerical check (tolerance leaves room for
    # Mosaic's f32-matmul pass decomposition at default precision).
    out_f32 = jax.block_until_ready(
        actor_forward(x, params, max_action, compute_dtype=jnp.float32))
    assert out_f32.shape == ref.shape
    assert jnp.allclose(out_f32, ref, atol=1e-4, rtol=1e-4)

    # Default bf16 MXU path (f32 accumulation): loose tolerance — x and the
    # hidden activations are re-quantized to bf16 each layer.
    out_bf16 = jax.block_until_ready(actor_forward(x, params, max_action))
    assert out_bf16.shape == ref.shape
    assert jnp.allclose(out_bf16, ref, atol=3e-2, rtol=3e-2)


if __name__ == "__main__":
    key = jax.random.PRNGKey(0)
    obs_dim, action_dim, max_action = 16, 4, 1.0

    k_params, k_x1, k_x2 = jax.random.split(key, 3)
    params = init_actor_params(k_params, obs_dim, action_dim)

    # Small batch: single grid tile.
    x_small = jax.random.normal(k_x1, (8, obs_dim), jnp.float32)
    _check(x_small, params, max_action)

    # Non-multiple-of-8 batch: exercises batch padding and the >=2-tile split
    # (two grid steps across the "parallel" batch axis).
    x_big = jax.random.normal(k_x2, (300, obs_dim), jnp.float32)
    _check(x_big, params, max_action)

    print("KERNEL_OK")
</pallas_src>

<mosaic_0001>
module attributes {stable_mosaic.version = 11 : i64} {
  func.func @kernel(%arg0: i32, %arg1: memref<1x1xf32, #tpu.memory_space<smem>>, %arg2: memref<8x16xf32, #tpu.memory_space<vmem>>, %arg3: memref<4x128x128xf32, #tpu.memory_space<vmem>>, %arg4: memref<4x1x128xf32, #tpu.memory_space<vmem>>, %arg5: memref<8x128xf32, #tpu.memory_space<vmem>>) attributes {dimension_semantics = [#tpu.dimension_semantics<parallel>], iteration_bounds = array<i64: 1>, scalar_prefetch = 0 : i64, scratch_operands = 0 : i64, tpu.core_type = #tpu.core_type<tc>, window_params = [{transform_indices = @transform_0, window_bounds = array<i64: 1, 1>}, {transform_indices = @transform_1, window_bounds = array<i64: 8, 16>}, {pipeline_mode = #tpu.pipeline_mode<synchronous>, transform_indices = @transform_2, window_bounds = array<i64: 4, 128, 128>}, {pipeline_mode = #tpu.pipeline_mode<synchronous>, transform_indices = @transform_3, window_bounds = array<i64: 4, 1, 128>}, {transform_indices = @transform_4, window_bounds = array<i64: 8, 128>}]} {
    %c0 = arith.constant 0 : index
    %c0_0 = arith.constant 0 : index
    %0 = memref.load %arg1[%c0, %c0_0] : memref<1x1xf32, #tpu.memory_space<smem>>
    %c0_1 = arith.constant 0 : index
    %c0_2 = arith.constant 0 : index
    %1 = vector.load %arg2[%c0_1, %c0_2] : memref<8x16xf32, #tpu.memory_space<vmem>>, vector<8x16xf32>
    %cst = arith.constant 0.000000e+00 : f32
    %2 = vector.broadcast %cst : f32 to vector<8x112xf32>
    %3 = tpu.concatenate %1, %2 in 1 : vector<8x16xf32>, vector<8x112xf32> -> vector<8x128xf32>
    %c0_3 = arith.constant 0 : index
    %c0_4 = arith.constant 0 : index
    %c0_5 = arith.constant 0 : index
    %4 = vector.load %arg3[%c0_3, %c0_4, %c0_5] : memref<4x128x128xf32, #tpu.memory_space<vmem>>, vector<1x128x128xf32>
    %5 = vector.shape_cast %4 : vector<1x128x128xf32> to vector<128x128xf32>
    %cst_6 = arith.constant dense<0.000000e+00> : vector<8x128xf32>
    %6 = tpu.matmul %3, %5, %cst_6 {dimension_numbers = #tpu.dot_dimension_numbers<[1], [0], [0], [1], [0, 0, 1, 1], [], []>} : vector<8x128xf32>, vector<128x128xf32>, vector<8x128xf32> -> vector<8x128xf32>
    %c0_7 = arith.constant 0 : index
    %c0_8 = arith.constant 0 : index
    %c0_9 = arith.constant 0 : index
    %7 = vector.load %arg4[%c0_7, %c0_8, %c0_9] : memref<4x1x128xf32, #tpu.memory_space<vmem>>, vector<1x1x128xf32>
    %8 = vector.shape_cast %7 : vector<1x1x128xf32> to vector<1x128xf32>
    %9 = vector.broadcast %8 : vector<1x128xf32> to vector<8x128xf32>
    %10 = arith.addf %6, %9 : vector<8x128xf32>
    %cst_10 = arith.constant 0.000000e+00 : f32
    %11 = vector.broadcast %cst_10 : f32 to vector<8x128xf32>
    %12 = arith.maximumf %10, %11 : vector<8x128xf32>
    %c1 = arith.constant 1 : index
    %c0_11 = arith.constant 0 : index
    %c0_12 = arith.constant 0 : index
    %13 = vector.load %arg3[%c1, %c0_11, %c0_12] : memref<4x128x128xf32, #tpu.memory_space<vmem>>, vector<1x128x128xf32>
    %14 = vector.shape_cast %13 : vector<1x128x128xf32> to vector<128x128xf32>
    %cst_13 = arith.constant dense<0.000000e+00> : vector<8x128xf32>
    %15 = tpu.matmul %12, %14, %cst_13 {dimension_numbers = #tpu.dot_dimension_numbers<[1], [0], [0], [1], [0, 0, 1, 1], [], []>} : vector<8x128xf32>, vector<128x128xf32>, vector<8x128xf32> -> vector<8x128xf32>
    %c1_14 = arith.constant 1 : index
    %c0_15 = arith.constant 0 : index
    %c0_16 = arith.constant 0 : index
    %16 = vector.load %arg4[%c1_14, %c0_15, %c0_16] : memref<4x1x128xf32, #tpu.memory_space<vmem>>, vector<1x1x128xf32>
    %17 = vector.shape_cast %16 : vector<1x1x128xf32> to vector<1x128xf32>
    %18 = vector.broadcast %17 : vector<1x128xf32> to vector<8x128xf32>
    %19 = arith.addf %15, %18 : vector<8x128xf32>
    %cst_17 = arith.constant 0.000000e+00 : f32
    %20 = vector.broadcast %cst_17 : f32 to vector<8x128xf32>
    %21 = arith.maximumf %19, %20 : vector<8x128xf32>
    %c2 = arith.constant 2 : index
    %c0_18 = arith.constant 0 : index
    %c0_19 = arith.constant 0 : index
    %22 = vector.load %arg3[%c2, %c0_18, %c0_19] : memref<4x128x128xf32, #tpu.memory_space<vmem>>, vector<1x128x128xf32>
    %23 = vector.shape_cast %22 : vector<1x128x128xf32> to vector<128x128xf32>
    %cst_20 = arith.constant dense<0.000000e+00> : vector<8x128xf32>
    %24 = tpu.matmul %21, %23, %cst_20 {dimension_numbers = #tpu.dot_dimension_numbers<[1], [0], [0], [1], [0, 0, 1, 1], [], []>} : vector<8x128xf32>, vector<128x128xf32>, vector<8x128xf32> -> vector<8x128xf32>
    %c2_21 = arith.constant 2 : index
    %c0_22 = arith.constant 0 : index
    %c0_23 = arith.constant 0 : index
    %25 = vector.load %arg4[%c2_21, %c0_22, %c0_23] : memref<4x1x128xf32, #tpu.memory_space<vmem>>, vector<1x1x128xf32>
    %26 = vector.shape_cast %25 : vector<1x1x128xf32> to vector<1x128xf32>
    %27 = vector.broadcast %26 : vector<1x128xf32> to vector<8x128xf32>
    %28 = arith.addf %24, %27 : vector<8x128xf32>
    %cst_24 = arith.constant 0.000000e+00 : f32
    %29 = vector.broadcast %cst_24 : f32 to vector<8x128xf32>
    %30 = arith.maximumf %28, %29 : vector<8x128xf32>
    %c3 = arith.constant 3 : index
    %c0_25 = arith.constant 0 : index
    %c0_26 = arith.constant 0 : index
    %31 = vector.load %arg3[%c3, %c0_25, %c0_26] : memref<4x128x128xf32, #tpu.memory_space<vmem>>, vector<1x128x128xf32>
    %32 = vector.shape_cast %31 : vector<1x128x128xf32> to vector<128x128xf32>
    %cst_27 = arith.constant dense<0.000000e+00> : vector<8x128xf32>
    %33 = tpu.matmul %30, %32, %cst_27 {dimension_numbers = #tpu.dot_dimension_numbers<[1], [0], [0], [1], [0, 0, 1, 1], [], []>} : vector<8x128xf32>, vector<128x128xf32>, vector<8x128xf32> -> vector<8x128xf32>
    %c3_28 = arith.constant 3 : index
    %c0_29 = arith.constant 0 : index
    %c0_30 = arith.constant 0 : index
    %34 = vector.load %arg4[%c3_28, %c0_29, %c0_30] : memref<4x1x128xf32, #tpu.memory_space<vmem>>, vector<1x1x128xf32>
    %35 = vector.shape_cast %34 : vector<1x1x128xf32> to vector<1x128xf32>
    %36 = vector.broadcast %35 : vector<1x128xf32> to vector<8x128xf32>
    %37 = arith.addf %33, %36 : vector<8x128xf32>
    %38 = math.tanh %37 : vector<8x128xf32>
    %39 = vector.broadcast %0 : f32 to vector<8x128xf32>
    %40 = arith.mulf %39, %38 : vector<8x128xf32>
    %c0_31 = arith.constant 0 : index
    %c0_32 = arith.constant 0 : index
    %41 = vector.load %arg5[%c0_31, %c0_32] : memref<8x128xf32, #tpu.memory_space<vmem>>, vector<8x128xf32>
    tpu.vector_store %arg5[%c0_31, %c0_32], %40 {strides = array<i32>} : memref<8x128xf32, #tpu.memory_space<vmem>>, vector<8x128xf32>,
    return
  }
  func.func @transform_0(%arg0: i32) -> (i32, i32) {
    %c0_i32 = arith.constant 0 : i32
    %c0_i32_0 = arith.constant 0 : i32
    %c0_i32_1 = arith.constant 0 : i32
    return %c0_i32, %c0_i32_0 : i32, i32
  }
  func.func @transform_1(%arg0: i32) -> (i32, i32) {
    %c0_i32 = arith.constant 0 : i32
    %c0_i32_0 = arith.constant 0 : i32
    return %arg0, %c0_i32 : i32, i32
  }
  func.func @transform_2(%arg0: i32) -> (i32, i32, i32) {
    %c0_i32 = arith.constant 0 : i32
    %c0_i32_0 = arith.constant 0 : i32
    %c0_i32_1 = arith.constant 0 : i32
    %c0_i32_2 = arith.constant 0 : i32
    return %c0_i32, %c0_i32_0, %c0_i32_1 : i32, i32, i32
  }
  func.func @transform_3(%arg0: i32) -> (i32, i32, i32) {
    %c0_i32 = arith.constant 0 : i32
    %c0_i32_0 = arith.constant 0 : i32
    %c0_i32_1 = arith.constant 0 : i32
    %c0_i32_2 = arith.constant 0 : i32
    return %c0_i32, %c0_i32_0, %c0_i32_1 : i32, i32, i32
  }
  func.func @transform_4(%arg0: i32) -> (i32, i32) {
    %c0_i32 = arith.constant 0 : i32
    %c0_i32_0 = arith.constant 0 : i32
    return %arg0, %c0_i32 : i32, i32
  }
}

</mosaic_0001>

<llo_original>
// kernel: tpu_custom_call.1
$region0: #{tpu_custom_call.1}
  #allocation0 [shape = 'u32[]', space=smem, size = 0x4, offset = 0x4, fixed_abs, tag = 'smem constant byte address 0x4 - core index']
  #allocation1 [shape = 'u32[144,128]{1,0:T(1,128)}', space=vmem, size = 0x12000, scoped, tag = 'internal scratch']
  #allocation2 [shape = 'f32[1,1]{1,0:T(1,128)S(6)}', space=smem, size = 0x200, scoped, tag = 'scoped memory for tpu_custom_call.1']
  %s0 = inlined_call_operand.<no memory space> [shape: f32[1,1], index: 0, kind: input, shape index: {}]
  %s1 = inlined_call_operand.hbm [shape: f32[8,16], index: 1, kind: input, shape index: {}]
  %s2 = inlined_call_operand.hbm [shape: f32[4,128,128], index: 2, kind: input, shape index: {}]
  %s3 = inlined_call_operand.vmem [shape: f32[4,1,128], index: 3, kind: input, shape index: {}]
  %s4 = inlined_call_operand.hbm [shape: f32[8,128], index: 4, kind: output, shape index: {}]
  %s5 = sld [smem:[#allocation0]]
  $region34: #{tpu_custom_call.1} parent=0
    _
  %s7 = ssub.s32 1, %s5
  %s8 = scalar_select 0, %s7, %s5
  %9 = sst [smem:[#allocation2]] %s0
  $region1: #{tpu_custom_call.1} parent=0
    #allocation3 [shape = 'u8[4096]{0}', space=vmem, size = 0x1000, scoped, tag = 'input window, operand 1, single buffered']
    #allocation4 [shape = 's32[1]{0}', space=sflag, size = 0x4, scoped, tag = 'scoped memory for tpu_custom_call.1']
    #allocation5 [shape = 's32[1]{0}', space=sflag, size = 0x4, scoped, tag = 'scoped memory for tpu_custom_call.1']
    #allocation6 [shape = 'u8[262144]{0}', space=vmem, size = 0x40000, scoped, tag = 'input window, operand 2, single buffered']
    #allocation7 [shape = 's32[1]{0}', space=sflag, size = 0x4, scoped, tag = 'scoped memory for tpu_custom_call.1']
    #allocation8 [shape = 'u8[4096]{0}', space=vmem, size = 0x1000, scoped, tag = 'output window, operand 0, single buffered']
    %10 = vsyncpa [#allocation4], 0
    %11 = vsyncpa [#allocation7], 0
    %12 = vsyncpa [#allocation5], 0
    // Predicated region
    $region2: #{tpu_custom_call.1} parent=1 // pred_check
      _
    $region3: #{tpu_custom_call.1} parent=1 // pred_check_branch
      %14 = sbr.rel (0) target = $region5
    $region4: #{tpu_custom_call.1} parent=1 // pred_region
      _
    $region5: #{tpu_custom_call.1} parent=1 // pred_fallthru
      _
    // Predicated region
    $region6: #{tpu_custom_call.1} parent=1 // pred_check
      _
    $region7: #{tpu_custom_call.1} parent=1 // pred_check_branch
      %16 = sbr.rel (0) target = $region9
    $region8: #{tpu_custom_call.1} parent=1 // pred_region
      %s18 = ssub.s32 128, 128
      %19 = vsyncadd [#allocation4], %s18
      %s21 = sshll.u32 [#allocation3], 4
      %s22 = int_to_ptr.vmem [resolvable:$true] %s21
      %24 = dma.hbm_to_vmem [thread:$0]  %s1, 128, %s22, [#allocation4]
    $region9: #{tpu_custom_call.1} parent=1 // pred_fallthru
      _
    // Predicated region
    $region10: #{tpu_custom_call.1} parent=1 // pred_check
      _
    $region11: #{tpu_custom_call.1} parent=1 // pred_check_branch
      %26 = sbr.rel (0) target = $region13
    $region12: #{tpu_custom_call.1} parent=1 // pred_region
      %s28 = ssub.s32 8192, 8192
      %29 = vsyncadd [#allocation7], %s28
      %s30 = sshll.u32 [#allocation6], 4
      %s31 = int_to_ptr.vmem [resolvable:$true] %s30
      %36 = dma.hbm_to_vmem [thread:$0]  %s2, 8192, %s31, [#allocation7], 128, 128, 8
    $region13: #{tpu_custom_call.1} parent=1 // pred_fallthru
      _
    // Predicated region
    $region14: #{tpu_custom_call.1} parent=1 // pred_check
      _
    $region15: #{tpu_custom_call.1} parent=1 // pred_check_branch
      %38 = sbr.rel (0) target = $region17
    $region16: #{tpu_custom_call.1} parent=1 // pred_region
      _
    $region17: #{tpu_custom_call.1} parent=1 // pred_fallthru
      _
    // Predicated region
    $region18: #{tpu_custom_call.1} parent=1 // pred_check
      _
    $region19: #{tpu_custom_call.1} parent=1 // pred_check_branch
      %40 = sbr.rel (0) target = $region21
    $region20: #{tpu_custom_call.1} parent=1 // pred_region
      %41 = dma.done [#allocation4], 128
    $region21: #{tpu_custom_call.1} parent=1 // pred_fallthru
      _
    // Predicated region
    $region22: #{tpu_custom_call.1} parent=1 // pred_check
      _
    $region23: #{tpu_custom_call.1} parent=1 // pred_check_branch
      %43 = sbr.rel (0) target = $region25
    $region24: #{tpu_custom_call.1} parent=1 // pred_region
      %44 = dma.done [#allocation7], 8192
    $region25: #{tpu_custom_call.1} parent=1 // pred_fallthru
      _
    %s45 = sld [smem:[#allocation2]]
    %v46 = vld [vmem:[#allocation3] sm:$0xff]
    %vm47 = vcmask 130048
    %v48 = vsel %vm47, %v46, 0.0
    %v49 = vld [vmem:[#allocation6] sm:$0xff]
    %v50 = vld [vmem:[#allocation6 + $0x8] sm:$0xff]
    %v51 = vld [vmem:[#allocation6 + $0x10] sm:$0xff]
    %v52 = vld [vmem:[#allocation6 + $0x18] sm:$0xff]
    %v53 = vld [vmem:[#allocation6 + $0x20] sm:$0xff]
    %v54 = vld [vmem:[#allocation6 + $0x28] sm:$0xff]
    %v55 = vld [vmem:[#allocation6 + $0x30] sm:$0xff]
    %v56 = vld [vmem:[#allocation6 + $0x38] sm:$0xff]
    %v57 = vld [vmem:[#allocation6 + $0x40] sm:$0xff]
    %v58 = vld [vmem:[#allocation6 + $0x48] sm:$0xff]
    %v59 = vld [vmem:[#allocation6 + $0x50] sm:$0xff]
    %v60 = vld [vmem:[#allocation6 + $0x58] sm:$0xff]
    %v61 = vld [vmem:[#allocation6 + $0x60] sm:$0xff]
    %v62 = vld [vmem:[#allocation6 + $0x68] sm:$0xff]
    %v63 = vld [vmem:[#allocation6 + $0x70] sm:$0xff]
    %v64 = vld [vmem:[#allocation6 + $0x78] sm:$0xff]
    %v65 = vld [vmem:[%s3] sm:$0x1]
    %v67 = vlaneseq
    %v68 = vshrl.u32 %v67, 7
    %v69 = vsub.s32 0, %v68
    %v70 = vrot.slane %v65, %v69
    %72 = vmatprep.subr.mxu0 0.0
    %73 = vmatpush1.msra.mxu0 %v49
    %74 = vmatprep.subr.mxu0 0.0
    %75 = vmatpush1.msra.mxu0 %v50
    %76 = vmatprep.subr.mxu0 0.0
    %77 = vmatpush1.msra.mxu0 %v51
    %78 = vmatprep.subr.mxu0 0.0
    %79 = vmatpush1.msra.mxu0 %v52
    %80 = vmatprep.subr.mxu0 0.0
    %81 = vmatpush1.msra.mxu0 %v53
    %82 = vmatprep.subr.mxu0 0.0
    %83 = vmatpush1.msra.mxu0 %v54
    %84 = vmatprep.subr.mxu0 0.0
    %85 = vmatpush1.msra.mxu0 %v55
    %86 = vmatprep.subr.mxu0 0.0
    %87 = vmatpush1.msra.mxu0 %v56
    %88 = vmatprep.subr.mxu0 0.0
    %89 = vmatpush1.msra.mxu0 %v57
    %90 = vmatprep.subr.mxu0 0.0
    %91 = vmatpush1.msra.mxu0 %v58
    %92 = vmatprep.subr.mxu0 0.0
    %93 = vmatpush1.msra.mxu0 %v59
    %94 = vmatprep.subr.mxu0 0.0
    %95 = vmatpush1.msra.mxu0 %v60
    %96 = vmatprep.subr.mxu0 0.0
    %97 = vmatpush1.msra.mxu0 %v61
    %98 = vmatprep.subr.mxu0 0.0
    %99 = vmatpush1.msra.mxu0 %v62
    %100 = vmatprep.subr.mxu0 0.0
    %101 = vmatpush1.msra.mxu0 %v63
    %102 = vmatprep.subr.mxu0 0.0
    %103 = vmatpush1.msra.mxu0 %v64
    %104 = vmatprep.subr.mxu0 0.0
    %105 = vmatpush1.msra.mxu0 0.0
    %106 = vmatprep.subr.mxu0 0.0
    %107 = vmatpush1.msra.mxu0 0.0
    %108 = vmatprep.subr.mxu0 0.0
    %109 = vmatpush1.msra.mxu0 0.0
    %110 = vmatprep.subr.mxu0 0.0
    %111 = vmatpush1.msra.mxu0 0.0
    %112 = vmatprep.subr.mxu0 0.0
    %113 = vmatpush1.msra.mxu0 0.0
    %114 = vmatprep.subr.mxu0 0.0
    %115 = vmatpush1.msra.mxu0 0.0
    %116 = vmatprep.subr.mxu0 0.0
    %117 = vmatpush1.msra.mxu0 0.0
    %118 = vmatprep.subr.mxu0 0.0
    %119 = vmatpush1.msra.mxu0 0.0
    %120 = vmatprep.subr.mxu0 0.0
    %121 = vmatpush1.msra.mxu0 0.0
    %122 = vmatprep.subr.mxu0 0.0
    %123 = vmatpush1.msra.mxu0 0.0
    %124 = vmatprep.subr.mxu0 0.0
    %125 = vmatpush1.msra.mxu0 0.0
    %126 = vmatprep.subr.mxu0 0.0
    %127 = vmatpush1.msra.mxu0 0.0
    %128 = vmatprep.subr.mxu0 0.0
    %129 = vmatpush1.msra.mxu0 0.0
    %130 = vmatprep.subr.mxu0 0.0
    %131 = vmatpush1.msra.mxu0 0.0
    %132 = vmatprep.subr.mxu0 0.0
    %133 = vmatpush1.msra.mxu0 0.0
    %134 = vmatprep.subr.mxu0 0.0
    %135 = vmatpush1.msra.mxu0 0.0
    %136 = vmatprep.mubr.f32.mxu0 0.0
    %137 = vmatmul.mubr.f32.gmra.mrb[0].mxu0 %v48
    %v138 = vpop.f32.mrb[0].mxu0
    %v139 = vadd.f32 %v70, %v138
    %v140 = vpop.f32.mrb[0].mxu0
    %141 = vdwg.mxu0
    %v142 = vmax.f32 %v139, 0.0
    %s143 = scalar_lea.vmem [#allocation6], 128
    %v144 = vld [vmem:[%s143] sm:$0xff]
    %v145 = vld [vmem:[%s143 + $0x8] sm:$0xff]
    %v146 = vld [vmem:[%s143 + $0x10] sm:$0xff]
    %v147 = vld [vmem:[%s143 + $0x18] sm:$0xff]
    %v148 = vld [vmem:[%s143 + $0x20] sm:$0xff]
    %v149 = vld [vmem:[%s143 + $0x28] sm:$0xff]
    %v150 = vld [vmem:[%s143 + $0x30] sm:$0xff]
    %v151 = vld [vmem:[%s143 + $0x38] sm:$0xff]
    %v152 = vld [vmem:[%s143 + $0x40] sm:$0xff]
    %v153 = vld [vmem:[%s143 + $0x48] sm:$0xff]
    %v154 = vld [vmem:[%s143 + $0x50] sm:$0xff]
    %v155 = vld [vmem:[%s143 + $0x58] sm:$0xff]
    %v156 = vld [vmem:[%s143 + $0x60] sm:$0xff]
    %v157 = vld [vmem:[%s143 + $0x68] sm:$0xff]
    %v158 = vld [vmem:[%s143 + $0x70] sm:$0xff]
    %v159 = vld [vmem:[%s143 + $0x78] sm:$0xff]
    %s160 = scalar_lea.vmem %s3, 1
    %v161 = vld [vmem:[%s160] sm:$0x1]
    %v163 = vlaneseq
    %v164 = vshrl.u32 %v163, 7
    %v165 = vsub.s32 0, %v164
    %v166 = vrot.slane %v161, %v165
    %168 = vmatprep.subr.mxu0 0.0
    %169 = vmatpush1.msra.mxu0 %v144
    %170 = vmatprep.subr.mxu0 0.0
    %171 = vmatpush1.msra.mxu0 %v145
    %172 = vmatprep.subr.mxu0 0.0
    %173 = vmatpush1.msra.mxu0 %v146
    %174 = vmatprep.subr.mxu0 0.0
    %175 = vmatpush1.msra.mxu0 %v147
    %176 = vmatprep.subr.mxu0 0.0
    %177 = vmatpush1.msra.mxu0 %v148
    %178 = vmatprep.subr.mxu0 0.0
    %179 = vmatpush1.msra.mxu0 %v149
    %180 = vmatprep.subr.mxu0 0.0
    %181 = vmatpush1.msra.mxu0 %v150
    %182 = vmatprep.subr.mxu0 0.0
    %183 = vmatpush1.msra.mxu0 %v151
    %184 = vmatprep.subr.mxu0 0.0
    %185 = vmatpush1.msra.mxu0 %v152
    %186 = vmatprep.subr.mxu0 0.0
    %187 = vmatpush1.msra.mxu0 %v153
    %188 = vmatprep.subr.mxu0 0.0
    %189 = vmatpush1.msra.mxu0 %v154
    %190 = vmatprep.subr.mxu0 0.0
    %191 = vmatpush1.msra.mxu0 %v155
    %192 = vmatprep.subr.mxu0 0.0
    %193 = vmatpush1.msra.mxu0 %v156
    %194 = vmatprep.subr.mxu0 0.0
    %195 = vmatpush1.msra.mxu0 %v157
    %196 = vmatprep.subr.mxu0 0.0
    %197 = vmatpush1.msra.mxu0 %v158
    %198 = vmatprep.subr.mxu0 0.0
    %199 = vmatpush1.msra.mxu0 %v159
    %200 = vmatprep.subr.mxu0 0.0
    %201 = vmatpush1.msra.mxu0 0.0
    %202 = vmatprep.subr.mxu0 0.0
    %203 = vmatpush1.msra.mxu0 0.0
    %204 = vmatprep.subr.mxu0 0.0
    %205 = vmatpush1.msra.mxu0 0.0
    %206 = vmatprep.subr.mxu0 0.0
    %207 = vmatpush1.msra.mxu0 0.0
    %208 = vmatprep.subr.mxu0 0.0
    %209 = vmatpush1.msra.mxu0 0.0
    %210 = vmatprep.subr.mxu0 0.0
    %211 = vmatpush1.msra.mxu0 0.0
    %212 = vmatprep.subr.mxu0 0.0
    %213 = vmatpush1.msra.mxu0 0.0
    %214 = vmatprep.subr.mxu0 0.0
    %215 = vmatpush1.msra.mxu0 0.0
    %216 = vmatprep.subr.mxu0 0.0
    %217 = vmatpush1.msra.mxu0 0.0
    %218 = vmatprep.subr.mxu0 0.0
    %219 = vmatpush1.msra.mxu0 0.0
    %220 = vmatprep.subr.mxu0 0.0
    %221 = vmatpush1.msra.mxu0 0.0
    %222 = vmatprep.subr.mxu0 0.0
    %223 = vmatpush1.msra.mxu0 0.0
    %224 = vmatprep.subr.mxu0 0.0
    %225 = vmatpush1.msra.mxu0 0.0
    %226 = vmatprep.subr.mxu0 0.0
    %227 = vmatpush1.msra.mxu0 0.0
    %228 = vmatprep.subr.mxu0 0.0
    %229 = vmatpush1.msra.mxu0 0.0
    %230 = vmatprep.subr.mxu0 0.0
    %231 = vmatpush1.msra.mxu0 0.0
    %232 = vmatprep.mubr.f32.mxu0 0.0
    %233 = vmatmul.mubr.f32.gmra.mrb[0].mxu0 %v142
    %v234 = vpop.f32.mrb[0].mxu0
    %v235 = vadd.f32 %v166, %v234
    %v236 = vpop.f32.mrb[0].mxu0
    %237 = vdwg.mxu0
    %v238 = vmax.f32 %v235, 0.0
    %s239 = scalar_lea.vmem [#allocation6], 256
    %v240 = vld [vmem:[%s239] sm:$0xff]
    %v241 = vld [vmem:[%s239 + $0x8] sm:$0xff]
    %v242 = vld [vmem:[%s239 + $0x10] sm:$0xff]
    %v243 = vld [vmem:[%s239 + $0x18] sm:$0xff]
    %v244 = vld [vmem:[%s239 + $0x20] sm:$0xff]
    %v245 = vld [vmem:[%s239 + $0x28] sm:$0xff]
    %v246 = vld [vmem:[%s239 + $0x30] sm:$0xff]
    %v247 = vld [vmem:[%s239 + $0x38] sm:$0xff]
    %v248 = vld [vmem:[%s239 + $0x40] sm:$0xff]
    %v249 = vld [vmem:[%s239 + $0x48] sm:$0xff]
    %v250 = vld [vmem:[%s239 + $0x50] sm:$0xff]
    %v251 = vld [vmem:[%s239 + $0x58] sm:$0xff]
    %v252 = vld [vmem:[%s239 + $0x60] sm:$0xff]
    %v253 = vld [vmem:[%s239 + $0x68] sm:$0xff]
    %v254 = vld [vmem:[%s239 + $0x70] sm:$0xff]
    %v255 = vld [vmem:[%s239 + $0x78] sm:$0xff]
    %s256 = scalar_lea.vmem %s3, 2
    %v257 = vld [vmem:[%s256] sm:$0x1]
    %v259 = vlaneseq
    %v260 = vshrl.u32 %v259, 7
    %v261 = vsub.s32 0, %v260
    %v262 = vrot.slane %v257, %v261
    %264 = vmatprep.subr.mxu0 0.0
    %265 = vmatpush1.msra.mxu0 %v240
    %266 = vmatprep.subr.mxu0 0.0
    %267 = vmatpush1.msra.mxu0 %v241
    %268 = vmatprep.subr.mxu0 0.0
    %269 = vmatpush1.msra.mxu0 %v242
    %270 = vmatprep.subr.mxu0 0.0
    %271 = vmatpush1.msra.mxu0 %v243
    %272 = vmatprep.subr.mxu0 0.0
    %273 = vmatpush1.msra.mxu0 %v244
    %274 = vmatprep.subr.mxu0 0.0
    %275 = vmatpush1.msra.mxu0 %v245
    %276 = vmatprep.subr.mxu0 0.0
    %277 = vmatpush1.msra.mxu0 %v246
    %278 = vmatprep.subr.mxu0 0.0
    %279 = vmatpush1.msra.mxu0 %v247
    %280 = vmatprep.subr.mxu0 0.0
    %281 = vmatpush1.msra.mxu0 %v248
    %282 = vmatprep.subr.mxu0 0.0
    %283 = vmatpush1.msra.mxu0 %v249
    %284 = vmatprep.subr.mxu0 0.0
    %285 = vmatpush1.msra.mxu0 %v250
    %286 = vmatprep.subr.mxu0 0.0
    %287 = vmatpush1.msra.mxu0 %v251
    %288 = vmatprep.subr.mxu0 0.0
    %289 = vmatpush1.msra.mxu0 %v252
    %290 = vmatprep.subr.mxu0 0.0
    %291 = vmatpush1.msra.mxu0 %v253
    %292 = vmatprep.subr.mxu0 0.0
    %293 = vmatpush1.msra.mxu0 %v254
    %294 = vmatprep.subr.mxu0 0.0
    %295 = vmatpush1.msra.mxu0 %v255
    %296 = vmatprep.subr.mxu0 0.0
    %297 = vmatpush1.msra.mxu0 0.0
    %298 = vmatprep.subr.mxu0 0.0
    %299 = vmatpush1.msra.mxu0 0.0
    %300 = vmatprep.subr.mxu0 0.0
    %301 = vmatpush1.msra.mxu0 0.0
    %302 = vmatprep.subr.mxu0 0.0
    %303 = vmatpush1.msra.mxu0 0.0
    %304 = vmatprep.subr.mxu0 0.0
    %305 = vmatpush1.msra.mxu0 0.0
    %306 = vmatprep.subr.mxu0 0.0
    %307 = vmatpush1.msra.mxu0 0.0
    %308 = vmatprep.subr.mxu0 0.0
    %309 = vmatpush1.msra.mxu0 0.0
    %310 = vmatprep.subr.mxu0 0.0
    %311 = vmatpush1.msra.mxu0 0.0
    %312 = vmatprep.subr.mxu0 0.0
    %313 = vmatpush1.msra.mxu0 0.0
    %314 = vmatprep.subr.mxu0 0.0
    %315 = vmatpush1.msra.mxu0 0.0
    %316 = vmatprep.subr.mxu0 0.0
    %317 = vmatpush1.msra.mxu0 0.0
    %318 = vmatprep.subr.mxu0 0.0
    %319 = vmatpush1.msra.mxu0 0.0
    %320 = vmatprep.subr.mxu0 0.0
    %321 = vmatpush1.msra.mxu0 0.0
    %322 = vmatprep.subr.mxu0 0.0
    %323 = vmatpush1.msra.mxu0 0.0
    %324 = vmatprep.subr.mxu0 0.0
    %325 = vmatpush1.msra.mxu0 0.0
    %326 = vmatprep.subr.mxu0 0.0
    %327 = vmatpush1.msra.mxu0 0.0
    %328 = vmatprep.mubr.f32.mxu0 0.0
    %329 = vmatmul.mubr.f32.gmra.mrb[0].mxu0 %v238
    %v330 = vpop.f32.mrb[0].mxu0
    %v331 = vadd.f32 %v262, %v330
    %v332 = vpop.f32.mrb[0].mxu0
    %333 = vdwg.mxu0
    %v334 = vmax.f32 %v331, 0.0
    %s335 = scalar_lea.vmem [#allocation6], 384
    %v336 = vld [vmem:[%s335] sm:$0xff]
    %v337 = vld [vmem:[%s335 + $0x8] sm:$0xff]
    %v338 = vld [vmem:[%s335 + $0x10] sm:$0xff]
    %v339 = vld [vmem:[%s335 + $0x18] sm:$0xff]
    %v340 = vld [vmem:[%s335 + $0x20] sm:$0xff]
    %v341 = vld [vmem:[%s335 + $0x28] sm:$0xff]
    %v342 = vld [vmem:[%s335 + $0x30] sm:$0xff]
    %v343 = vld [vmem:[%s335 + $0x38] sm:$0xff]
    %v344 = vld [vmem:[%s335 + $0x40] sm:$0xff]
    %v345 = vld [vmem:[%s335 + $0x48] sm:$0xff]
    %v346 = vld [vmem:[%s335 + $0x50] sm:$0xff]
    %v347 = vld [vmem:[%s335 + $0x58] sm:$0xff]
    %v348 = vld [vmem:[%s335 + $0x60] sm:$0xff]
    %v349 = vld [vmem:[%s335 + $0x68] sm:$0xff]
    %v350 = vld [vmem:[%s335 + $0x70] sm:$0xff]
    %v351 = vld [vmem:[%s335 + $0x78] sm:$0xff]
    %s352 = scalar_lea.vmem %s3, 3
    %v353 = vld [vmem:[%s352] sm:$0x1]
    %v355 = vlaneseq
    %v356 = vshrl.u32 %v355, 7
    %v357 = vsub.s32 0, %v356
    %v358 = vrot.slane %v353, %v357
    %360 = vmatprep.subr.mxu0 0.0
    %361 = vmatpush1.msra.mxu0 %v336
    %362 = vmatprep.subr.mxu0 0.0
    %363 = vmatpush1.msra.mxu0 %v337
    %364 = vmatprep.subr.mxu0 0.0
    %365 = vmatpush1.msra.mxu0 %v338
    %366 = vmatprep.subr.mxu0 0.0
    %367 = vmatpush1.msra.mxu0 %v339
    %368 = vmatprep.subr.mxu0 0.0
    %369 = vmatpush1.msra.mxu0 %v340
    %370 = vmatprep.subr.mxu0 0.0
    %371 = vmatpush1.msra.mxu0 %v341
    %372 = vmatprep.subr.mxu0 0.0
    %373 = vmatpush1.msra.mxu0 %v342
    %374 = vmatprep.subr.mxu0 0.0
    %375 = vmatpush1.msra.mxu0 %v343
    %376 = vmatprep.subr.mxu0 0.0
    %377 = vmatpush1.msra.mxu0 %v344
    %378 = vmatprep.subr.mxu0 0.0
    %379 = vmatpush1.msra.mxu0 %v345
    %380 = vmatprep.subr.mxu0 0.0
    %381 = vmatpush1.msra.mxu0 %v346
    %382 = vmatprep.subr.mxu0 0.0
    %383 = vmatpush1.msra.mxu0 %v347
    %384 = vmatprep.subr.mxu0 0.0
    %385 = vmatpush1.msra.mxu0 %v348
    %386 = vmatprep.subr.mxu0 0.0
    %387 = vmatpush1.msra.mxu0 %v349
    %388 = vmatprep.subr.mxu0 0.0
    %389 = vmatpush1.msra.mxu0 %v350
    %390 = vmatprep.subr.mxu0 0.0
    %391 = vmatpush1.msra.mxu0 %v351
    %392 = vmatprep.subr.mxu0 0.0
    %393 = vmatpush1.msra.mxu0 0.0
    %394 = vmatprep.subr.mxu0 0.0
    %395 = vmatpush1.msra.mxu0 0.0
    %396 = vmatprep.subr.mxu0 0.0
    %397 = vmatpush1.msra.mxu0 0.0
    %398 = vmatprep.subr.mxu0 0.0
    %399 = vmatpush1.msra.mxu0 0.0
    %400 = vmatprep.subr.mxu0 0.0
    %401 = vmatpush1.msra.mxu0 0.0
    %402 = vmatprep.subr.mxu0 0.0
    %403 = vmatpush1.msra.mxu0 0.0
    %404 = vmatprep.subr.mxu0 0.0
    %405 = vmatpush1.msra.mxu0 0.0
    %406 = vmatprep.subr.mxu0 0.0
    %407 = vmatpush1.msra.mxu0 0.0
    %408 = vmatprep.subr.mxu0 0.0
    %409 = vmatpush1.msra.mxu0 0.0
    %410 = vmatprep.subr.mxu0 0.0
    %411 = vmatpush1.msra.mxu0 0.0
    %412 = vmatprep.subr.mxu0 0.0
    %413 = vmatpush1.msra.mxu0 0.0
    %414 = vmatprep.subr.mxu0 0.0
    %415 = vmatpush1.msra.mxu0 0.0
    %416 = vmatprep.subr.mxu0 0.0
    %417 = vmatpush1.msra.mxu0 0.0
    %418 = vmatprep.subr.mxu0 0.0
    %419 = vmatpush1.msra.mxu0 0.0
    %420 = vmatprep.subr.mxu0 0.0
    %421 = vmatpush1.msra.mxu0 0.0
    %422 = vmatprep.subr.mxu0 0.0
    %423 = vmatpush1.msra.mxu0 0.0
    %424 = vmatprep.mubr.f32.mxu0 0.0
    %425 = vmatmul.mubr.f32.gmra.mrb[0].mxu0 %v334
    %v426 = vpop.f32.mrb[0].mxu0
    %v427 = vadd.f32 %v358, %v426
    %v428 = vpop.f32.mrb[0].mxu0
    %429 = vdwg.mxu0
    %v430 = vtanh.pop %v427
    %v431 = vstv %s45
    %v432 = vmul.f32 %v431, %v430
    %433 = vst [vmem:[#allocation8] sm:$0xff] %v432
    // Predicated region
    $region26: #{tpu_custom_call.1} parent=1 // pred_check
      _
    $region27: #{tpu_custom_call.1} parent=1 // pred_check_branch
      %435 = sbr.rel (0) target = $region29
    $region28: #{tpu_custom_call.1} parent=1 // pred_region
      %s437 = ssub.s32 128, 128
      %438 = vsyncadd [#allocation5], %s437
      %s440 = sshll.u32 [#allocation8], 4
      %s441 = int_to_ptr.vmem [resolvable:$true] %s440
      %443 = dma.vmem_to_hbm [thread:$0]  %s441, 128, %s4, [#allocation5]
    $region29: #{tpu_custom_call.1} parent=1 // pred_fallthru
      _
    // Predicated region
    $region30: #{tpu_custom_call.1} parent=1 // pred_check
      _
    $region31: #{tpu_custom_call.1} parent=1 // pred_check_branch
      %445 = sbr.rel (0) target = $region33
    $region32: #{tpu_custom_call.1} parent=1 // pred_region
      %446 = dma.done [#allocation5], 128
    $region33: #{tpu_custom_call.1} parent=1 // pred_fallthru
      _
    %447 = vsyncpa [#allocation4], 1
    %448 = vsyncpa [#allocation7], 1
    %449 = vsyncpa [#allocation5], 1

</llo_original>
